<compile_context>
chip_gen: v7x
topology: tpu7x:2x2x1
jax: 0.10.0
libtpu: 0.0.40
codegen_flags: <defaults>
</compile_context>

<pallas_src>
import functools

import jax
import jax.numpy as jnp
from jax.experimental import pallas as pl
from jax.experimental.pallas import tpu as pltpu

LANES = 128  # lane-dense padded width for the classifier / output


def gcn_kernel(a_ref, xw_ref, t1_ref, w2_ref, t2_ref, pool_ref, wl_ref, bl_ref,
               out_ref, *, num_classes):
    a = a_ref[...]                                                  # [N, N] bf16

    # ---- GCNConv1 (X @ W1' hoisted to wrapper; BN folded): relu(A @ XW1 + t1')
    h = jnp.dot(a, xw_ref[...], preferred_element_type=jnp.float32) + t1_ref[...]
    h = jnp.maximum(h, 0.0)                                         # [N, H1] f32
    # dropout: identity (eval mode)

    # ---- GCNConv2 (BN folded): relu(A @ (H @ W2') + t2') ----
    hw = jnp.dot(h.astype(jnp.bfloat16), w2_ref[...],
                 preferred_element_type=jnp.float32)                # [N, H2] f32
    h2 = jnp.dot(a, hw.astype(jnp.bfloat16),
                 preferred_element_type=jnp.float32) + t2_ref[...]  # [N, H2] f32
    h2 = jnp.maximum(h2, 0.0)

    # ---- global_mean_pool as a normalized pooling matmul (pad graphs = 0-rows)
    pooled = jnp.dot(pool_ref[...], h2.astype(jnp.bfloat16),
                     preferred_element_type=jnp.float32)            # [Gp, H2] f32

    # ---- Linear (padded to 128 lanes) + masked log_softmax over real lanes ---
    logits = jnp.dot(pooled.astype(jnp.bfloat16), wl_ref[...],
                     preferred_element_type=jnp.float32) + bl_ref[...]  # [Gp, 128]
    col = jax.lax.broadcasted_iota(jnp.int32, logits.shape, 1)
    logits = jnp.where(col < num_classes, logits, -1e30)   # pad lanes -> exp==0
    m = jnp.max(logits, axis=1, keepdims=True)
    z = logits - m
    lse = jnp.log(jnp.sum(jnp.exp(z), axis=1, keepdims=True))
    out_ref[...] = z - lse                                          # [Gp, 128]


def gcn_forward(a_hat, x, params, pool, num_classes):
    """a_hat: [B,N,N], x: [B,N,F], pool: [B,G,N].
    params = (w1_folded, t1_folded, w2_folded, t2_folded, wl, bl)."""
    w1f, t1f, w2f, t2f, wl, bl = params
    B, N, _ = a_hat.shape
    G = pool.shape[1]
    H1 = w1f.shape[1]
    H2 = w2f.shape[1]
    C = num_classes
    Gp = max(8, ((G + 7) // 8) * 8)          # sublane-padded graphs per batch

    bf16 = jnp.bfloat16
    # Hoisted layer-1 feature transform: one batched XLA matmul removes one
    # MXU round-trip from the serial in-kernel dependency chain.
    xw_bf = jnp.einsum('bnf,fh->bnh', x, w1f).astype(bf16)          # [B, N, H1]

    a_bf = a_hat.astype(bf16)
    w2_bf = w2f.astype(bf16)
    pool_pad = jnp.zeros((B, Gp, N), jnp.float32).at[:, :G, :].set(pool).astype(bf16)
    # Lane-dense classifier: zero weights / zero bias on padded columns; the
    # kernel masks pad lanes with an iota compare before the softmax.
    wl_pad = jnp.zeros((H2, LANES), jnp.float32).at[:, :C].set(wl).astype(bf16)
    bl_pad = jnp.zeros((1, LANES), jnp.float32).at[:, :C].set(bl)

    kernel = functools.partial(gcn_kernel, num_classes=C)
    out_pad = pl.pallas_call(
        kernel,
        out_shape=jax.ShapeDtypeStruct((B, Gp, LANES), jnp.float32),
        grid_spec=pltpu.PrefetchScalarGridSpec(
            num_scalar_prefetch=0,
            grid=(B,),
            in_specs=[
                pl.BlockSpec((None, N, N), lambda b: (b, 0, 0)),      # a_hat[b]
                pl.BlockSpec((None, N, H1), lambda b: (b, 0, 0)),     # xw[b]
                pl.BlockSpec((1, H1), lambda b: (0, 0)),              # t1' (resident)
                pl.BlockSpec((H1, H2), lambda b: (0, 0)),             # W2' (resident)
                pl.BlockSpec((1, H2), lambda b: (0, 0)),              # t2' (resident)
                pl.BlockSpec((None, Gp, N), lambda b: (b, 0, 0)),     # pool[b]
                pl.BlockSpec((H2, LANES), lambda b: (0, 0)),          # Wl (resident)
                pl.BlockSpec((1, LANES), lambda b: (0, 0)),           # bl (resident)
            ],
            out_specs=pl.BlockSpec((None, Gp, LANES), lambda b: (b, 0, 0)),
        ),
        compiler_params=pltpu.CompilerParams(
            dimension_semantics=("parallel",),
            vmem_limit_bytes=32 * 1024 * 1024,
        ),
    )(a_bf, xw_bf, t1f.astype(jnp.float32), w2_bf, t2f.astype(jnp.float32),
      pool_pad, wl_pad, bl_pad)
    return out_pad[:, :G, :C]


def build_normalized_adjacency(edge_index, num_nodes):
    """Dense D^{-1/2}(A+I)D^{-1/2} matching torch_geometric gcn_norm."""
    src, dst = edge_index
    loop = jnp.arange(num_nodes, dtype=src.dtype)
    src = jnp.concatenate([src, loop])
    dst = jnp.concatenate([dst, loop])
    deg = jnp.zeros((num_nodes,), jnp.float32).at[dst].add(1.0)
    dinv = jnp.where(deg > 0, 1.0 / jnp.sqrt(deg), 0.0)
    w = dinv[src] * dinv[dst]
    # out[i] = sum_j A_hat[i, j] * x[j]   (message j -> i)
    a_hat = jnp.zeros((num_nodes, num_nodes), jnp.float32).at[dst, src].add(w)
    return a_hat


def build_pool_matrix(batch, num_graphs, num_nodes):
    onehot = (batch[None, :] == jnp.arange(num_graphs)[:, None]).astype(jnp.float32)
    counts = jnp.maximum(onehot.sum(axis=1, keepdims=True), 1.0)
    return onehot / counts                           # [G, N]


def fold_batchnorm(gamma, beta, running_mean, running_var, eps=1e-5):
    scale = gamma / jnp.sqrt(running_var + eps)
    shift = beta - running_mean * scale
    return scale[None, :], shift[None, :]            # [1, dim] for broadcasting


if __name__ == "__main__":
    key = jax.random.PRNGKey(0)
    ks = jax.random.split(key, 12)

    # ---- sizes ----
    B = 4                  # graph-batches processed by one pallas_call (grid)
    N = 16                 # nodes per batch (2 graphs x 8 nodes)
    F_IN = 8               # num_node_features
    H1, H2 = 64, 32
    C = 4                  # num_classes
    G = 2                  # graphs per batch

    # ---- graph: two 8-node rings, symmetric edge list ----
    def ring_edges(offset, n):
        s = jnp.arange(n) + offset
        d = (jnp.arange(n) + 1) % n + offset
        return jnp.stack([jnp.concatenate([s, d]), jnp.concatenate([d, s])])

    e0 = ring_edges(0, 8)
    e1 = ring_edges(8, 8)
    edge_index = jnp.concatenate([e0, e1], axis=1).astype(jnp.int32)  # [2, E]
    batch_vec = jnp.concatenate([jnp.zeros(8, jnp.int32), jnp.ones(8, jnp.int32)])

    a_hat_single = build_normalized_adjacency(edge_index, N)          # [N, N]
    pool_single = build_pool_matrix(batch_vec, G, N)                  # [G, N]
    a_hat = jnp.broadcast_to(a_hat_single, (B, N, N))
    pool = jnp.broadcast_to(pool_single, (B, G, N))

    # ---- inputs ----
    x = jax.random.normal(ks[0], (B, N, F_IN), jnp.float32)

    # ---- deterministic parameter init (synthetic, not a checkpoint) ----
    w1 = 0.3 * jax.random.normal(ks[1], (F_IN, H1), jnp.float32)
    b1 = 0.1 * jax.random.normal(ks[2], (1, H1), jnp.float32)
    w2 = 0.3 * jax.random.normal(ks[3], (H1, H2), jnp.float32)
    b2 = 0.1 * jax.random.normal(ks[4], (1, H2), jnp.float32)
    wl = 0.3 * jax.random.normal(ks[5], (H2, C), jnp.float32)
    bl = 0.1 * jax.random.normal(ks[6], (1, C), jnp.float32)

    g1 = 1.0 + 0.1 * jax.random.normal(ks[7], (H1,), jnp.float32)
    be1 = 0.1 * jax.random.normal(ks[8], (H1,), jnp.float32)
    rm1 = 0.1 * jax.random.normal(ks[9], (H1,), jnp.float32)
    rv1 = 0.5 + jnp.abs(jax.random.normal(ks[10], (H1,), jnp.float32))

    g2 = 1.0 + 0.1 * jax.random.normal(ks[11], (H2,), jnp.float32)
    be2 = jnp.zeros((H2,), jnp.float32)
    rm2 = jnp.zeros((H2,), jnp.float32)
    rv2 = jnp.ones((H2,), jnp.float32)

    s1, t1 = fold_batchnorm(g1, be1, rm1, rv1)
    s2, t2 = fold_batchnorm(g2, be2, rm2, rv2)

    # ---- fold BN scale/shift into conv weights & biases ----
    #   (A(XW)+b)*s + t  ==  A(X(W*s)) + (b*s + t)
    w1f = w1 * s1
    t1f = b1 * s1 + t1
    w2f = w2 * s2
    t2f = b2 * s2 + t2

    params = (w1f, t1f, w2f, t2f, wl, bl)
    out = gcn_forward(a_hat, x, params, pool, num_classes=C)
    out = jax.block_until_ready(out)
    assert out.shape == (B, G, C)

    # ---- bf16-matched pure-JAX reference (same math as the kernel) ----
    bf16 = jnp.bfloat16
    a_bf = a_hat.astype(bf16)
    xw_bf = jnp.einsum('bnf,fh->bnh', x, w1f).astype(bf16)
    h = jnp.maximum(
        jnp.einsum('bij,bjh->bih', a_bf, xw_bf,
                   preferred_element_type=jnp.float32) + t1f, 0.0)
    hw = jnp.einsum('bih,ho->bio', h.astype(bf16), w2f.astype(bf16),
                    preferred_element_type=jnp.float32)
    h2 = jnp.maximum(
        jnp.einsum('bij,bjo->bio', a_bf, hw.astype(bf16),
                   preferred_element_type=jnp.float32) + t2f, 0.0)
    pooled = jnp.einsum('bgn,bno->bgo', pool.astype(bf16), h2.astype(bf16),
                        preferred_element_type=jnp.float32)
    logits = jnp.einsum('bgo,oc->bgc', pooled.astype(bf16), wl.astype(bf16),
                        preferred_element_type=jnp.float32) + bl
    ref_bf16 = logits - jax.scipy.special.logsumexp(logits, axis=2, keepdims=True)
    assert jnp.allclose(out, ref_bf16, atol=1e-2, rtol=1e-2), "mismatch vs bf16 reference"

    # ---- full-f32 reference (module semantics), loose tolerance for bf16 ops ----
    c1 = jnp.einsum('bij,bjh->bih', a_hat, jnp.einsum('bnf,fh->bnh', x, w1)) + b1
    hf = jnp.maximum(c1 * s1 + t1, 0.0)
    c2 = jnp.einsum('bij,bjo->bio', a_hat, jnp.einsum('bnh,ho->bno', hf, w2)) + b2
    hf2 = jnp.maximum(c2 * s2 + t2, 0.0)
    logits_f = jnp.einsum('bgn,bno->bgo', pool, hf2) @ wl + bl
    ref_f32 = logits_f - jax.scipy.special.logsumexp(logits_f, axis=2, keepdims=True)
    assert jnp.allclose(out, ref_f32, atol=1e-1, rtol=1e-1), "mismatch vs f32 reference"

    print("KERNEL_OK")
</pallas_src>

<mosaic_0001>
module attributes {stable_mosaic.version = 11 : i64} {
  func.func @gcn_kernel(%arg0: i32, %arg1: memref<1x16x16xbf16, #tpu.memory_space<vmem>>, %arg2: memref<1x16x64xbf16, #tpu.memory_space<vmem>>, %arg3: memref<1x64xf32, #tpu.memory_space<vmem>>, %arg4: memref<64x32xbf16, #tpu.memory_space<vmem>>, %arg5: memref<1x32xf32, #tpu.memory_space<vmem>>, %arg6: memref<1x8x16xbf16, #tpu.memory_space<vmem>>, %arg7: memref<32x128xbf16, #tpu.memory_space<vmem>>, %arg8: memref<1x128xf32, #tpu.memory_space<vmem>>, %arg9: memref<1x8x128xf32, #tpu.memory_space<vmem>>) attributes {dimension_semantics = [#tpu.dimension_semantics<parallel>], iteration_bounds = array<i64: 4>, scalar_prefetch = 0 : i64, scratch_operands = 0 : i64, tpu.core_type = #tpu.core_type<tc>, window_params = [{transform_indices = @transform_0, window_bounds = array<i64: 1, 16, 16>}, {transform_indices = @transform_1, window_bounds = array<i64: 1, 16, 64>}, {pipeline_mode = #tpu.pipeline_mode<synchronous>, transform_indices = @transform_2, window_bounds = array<i64: 1, 64>}, {pipeline_mode = #tpu.pipeline_mode<synchronous>, transform_indices = @transform_3, window_bounds = array<i64: 64, 32>}, {pipeline_mode = #tpu.pipeline_mode<synchronous>, transform_indices = @transform_4, window_bounds = array<i64: 1, 32>}, {transform_indices = @transform_5, window_bounds = array<i64: 1, 8, 16>}, {pipeline_mode = #tpu.pipeline_mode<synchronous>, transform_indices = @transform_6, window_bounds = array<i64: 32, 128>}, {pipeline_mode = #tpu.pipeline_mode<synchronous>, transform_indices = @transform_7, window_bounds = array<i64: 1, 128>}, {transform_indices = @transform_8, window_bounds = array<i64: 1, 8, 128>}]} {
    %c0 = arith.constant 0 : index
    %c0_0 = arith.constant 0 : index
    %c0_1 = arith.constant 0 : index
    %0 = vector.load %arg1[%c0, %c0_0, %c0_1] : memref<1x16x16xbf16, #tpu.memory_space<vmem>>, vector<1x16x16xbf16>
    %1 = vector.shape_cast %0 : vector<1x16x16xbf16> to vector<16x16xbf16>
    %c0_2 = arith.constant 0 : index
    %c0_3 = arith.constant 0 : index
    %c0_4 = arith.constant 0 : index
    %2 = vector.load %arg2[%c0_2, %c0_3, %c0_4] : memref<1x16x64xbf16, #tpu.memory_space<vmem>>, vector<1x16x64xbf16>
    %3 = vector.shape_cast %2 : vector<1x16x64xbf16> to vector<16x64xbf16>
    %cst = arith.constant dense<0.000000e+00> : vector<16x64xf32>
    %4 = tpu.matmul %1, %3, %cst {dimension_numbers = #tpu.dot_dimension_numbers<[1], [0], [0], [1], [0, 0, 1, 1], [], []>} : vector<16x16xbf16>, vector<16x64xbf16>, vector<16x64xf32> -> vector<16x64xf32>
    %c0_5 = arith.constant 0 : index
    %c0_6 = arith.constant 0 : index
    %5 = vector.load %arg3[%c0_5, %c0_6] : memref<1x64xf32, #tpu.memory_space<vmem>>, vector<1x64xf32>
    %6 = vector.broadcast %5 : vector<1x64xf32> to vector<16x64xf32>
    %7 = arith.addf %4, %6 : vector<16x64xf32>
    %cst_7 = arith.constant 0.000000e+00 : f32
    %8 = vector.broadcast %cst_7 : f32 to vector<16x64xf32>
    %9 = arith.maximumf %7, %8 : vector<16x64xf32>
    %10 = arith.truncf %9 : vector<16x64xf32> to vector<16x64xbf16>
    %c0_8 = arith.constant 0 : index
    %c0_9 = arith.constant 0 : index
    %11 = vector.load %arg4[%c0_8, %c0_9] : memref<64x32xbf16, #tpu.memory_space<vmem>>, vector<64x32xbf16>
    %cst_10 = arith.constant dense<0.000000e+00> : vector<16x32xf32>
    %12 = tpu.matmul %10, %11, %cst_10 {dimension_numbers = #tpu.dot_dimension_numbers<[1], [0], [0], [1], [0, 0, 1, 1], [], []>} : vector<16x64xbf16>, vector<64x32xbf16>, vector<16x32xf32> -> vector<16x32xf32>
    %13 = arith.truncf %12 : vector<16x32xf32> to vector<16x32xbf16>
    %cst_11 = arith.constant dense<0.000000e+00> : vector<16x32xf32>
    %14 = tpu.matmul %1, %13, %cst_11 {dimension_numbers = #tpu.dot_dimension_numbers<[1], [0], [0], [1], [0, 0, 1, 1], [], []>} : vector<16x16xbf16>, vector<16x32xbf16>, vector<16x32xf32> -> vector<16x32xf32>
    %c0_12 = arith.constant 0 : index
    %c0_13 = arith.constant 0 : index
    %15 = vector.load %arg5[%c0_12, %c0_13] : memref<1x32xf32, #tpu.memory_space<vmem>>, vector<1x32xf32>
    %16 = vector.broadcast %15 : vector<1x32xf32> to vector<16x32xf32>
    %17 = arith.addf %14, %16 : vector<16x32xf32>
    %cst_14 = arith.constant 0.000000e+00 : f32
    %18 = vector.broadcast %cst_14 : f32 to vector<16x32xf32>
    %19 = arith.maximumf %17, %18 : vector<16x32xf32>
    %c0_15 = arith.constant 0 : index
    %c0_16 = arith.constant 0 : index
    %c0_17 = arith.constant 0 : index
    %20 = vector.load %arg6[%c0_15, %c0_16, %c0_17] : memref<1x8x16xbf16, #tpu.memory_space<vmem>>, vector<1x8x16xbf16>
    %21 = vector.shape_cast %20 : vector<1x8x16xbf16> to vector<8x16xbf16>
    %22 = arith.truncf %19 : vector<16x32xf32> to vector<16x32xbf16>
    %cst_18 = arith.constant dense<0.000000e+00> : vector<8x32xf32>
    %23 = tpu.matmul %21, %22, %cst_18 {dimension_numbers = #tpu.dot_dimension_numbers<[1], [0], [0], [1], [0, 0, 1, 1], [], []>} : vector<8x16xbf16>, vector<16x32xbf16>, vector<8x32xf32> -> vector<8x32xf32>
    %24 = arith.truncf %23 : vector<8x32xf32> to vector<8x32xbf16>
    %c0_19 = arith.constant 0 : index
    %c0_20 = arith.constant 0 : index
    %25 = vector.load %arg7[%c0_19, %c0_20] : memref<32x128xbf16, #tpu.memory_space<vmem>>, vector<32x128xbf16>
    %cst_21 = arith.constant dense<0.000000e+00> : vector<8x128xf32>
    %26 = tpu.matmul %24, %25, %cst_21 {dimension_numbers = #tpu.dot_dimension_numbers<[1], [0], [0], [1], [0, 0, 1, 1], [], []>} : vector<8x32xbf16>, vector<32x128xbf16>, vector<8x128xf32> -> vector<8x128xf32>
    %c0_22 = arith.constant 0 : index
    %c0_23 = arith.constant 0 : index
    %27 = vector.load %arg8[%c0_22, %c0_23] : memref<1x128xf32, #tpu.memory_space<vmem>>, vector<1x128xf32>
    %28 = vector.broadcast %27 : vector<1x128xf32> to vector<8x128xf32>
    %29 = arith.addf %26, %28 : vector<8x128xf32>
    %30 = tpu.iota {dimensions = array<i32: 1>} : vector<8x128xi32>
    %c4_i32 = arith.constant 4 : i32
    %31 = vector.broadcast %c4_i32 : i32 to vector<8x128xi32>
    %32 = arith.cmpi slt, %30, %31 : vector<8x128xi32>
    %cst_24 = arith.constant -1.000000e+30 : f32
    %33 = vector.broadcast %cst_24 : f32 to vector<8x128xf32>
    %34 = arith.select %32, %29, %33 : vector<8x128xi1>, vector<8x128xf32>
    %cst_25 = arith.constant dense<0xFF800000> : vector<8xf32>
    %35 = vector.multi_reduction <maximumf>, %34, %cst_25 [1] : vector<8x128xf32> to vector<8xf32>
    %36 = vector.shape_cast %35 : vector<8xf32> to vector<8x1xf32>
    %37 = vector.broadcast %36 : vector<8x1xf32> to vector<8x128xf32>
    %38 = arith.subf %34, %37 : vector<8x128xf32>
    %39 = math.exp %38 : vector<8x128xf32>
    %cst_26 = arith.constant dense<0.000000e+00> : vector<8xf32>
    %40 = vector.multi_reduction <add>, %39, %cst_26 [1] : vector<8x128xf32> to vector<8xf32>
    %41 = vector.shape_cast %40 : vector<8xf32> to vector<8x1xf32>
    %42 = math.log %41 : vector<8x1xf32>
    %43 = vector.broadcast %42 : vector<8x1xf32> to vector<8x128xf32>
    %44 = arith.subf %38, %43 : vector<8x128xf32>
    %c0_27 = arith.constant 0 : index
    %c0_28 = arith.constant 0 : index
    %c0_29 = arith.constant 0 : index
    %45 = vector.load %arg9[%c0_27, %c0_28, %c0_29] : memref<1x8x128xf32, #tpu.memory_space<vmem>>, vector<1x8x128xf32>
    %46 = vector.shape_cast %45 : vector<1x8x128xf32> to vector<8x128xf32>
    %47 = vector.shape_cast %44 : vector<8x128xf32> to vector<1x8x128xf32>
    tpu.vector_store %arg9[%c0_27, %c0_28, %c0_29], %47 {strides = array<i32>} : memref<1x8x128xf32, #tpu.memory_space<vmem>>, vector<1x8x128xf32>,
    return
  }
  func.func @transform_0(%arg0: i32) -> (i32, i32, i32) {
    %c0_i32 = arith.constant 0 : i32
    %c0_i32_0 = arith.constant 0 : i32
    %c0_i32_1 = arith.constant 0 : i32
    return %arg0, %c0_i32, %c0_i32_0 : i32, i32, i32
  }
  func.func @transform_1(%arg0: i32) -> (i32, i32, i32) {
    %c0_i32 = arith.constant 0 : i32
    %c0_i32_0 = arith.constant 0 : i32
    %c0_i32_1 = arith.constant 0 : i32
    return %arg0, %c0_i32, %c0_i32_0 : i32, i32, i32
  }
  func.func @transform_2(%arg0: i32) -> (i32, i32) {
    %c0_i32 = arith.constant 0 : i32
    %c0_i32_0 = arith.constant 0 : i32
    %c0_i32_1 = arith.constant 0 : i32
    return %c0_i32, %c0_i32_0 : i32, i32
  }
  func.func @transform_3(%arg0: i32) -> (i32, i32) {
    %c0_i32 = arith.constant 0 : i32
    %c0_i32_0 = arith.constant 0 : i32
    %c0_i32_1 = arith.constant 0 : i32
    return %c0_i32, %c0_i32_0 : i32, i32
  }
  func.func @transform_4(%arg0: i32) -> (i32, i32) {
    %c0_i32 = arith.constant 0 : i32
    %c0_i32_0 = arith.constant 0 : i32
    %c0_i32_1 = arith.constant 0 : i32
    return %c0_i32, %c0_i32_0 : i32, i32
  }
  func.func @transform_5(%arg0: i32) -> (i32, i32, i32) {
    %c0_i32 = arith.constant 0 : i32
    %c0_i32_0 = arith.constant 0 : i32
    %c0_i32_1 = arith.constant 0 : i32
    return %arg0, %c0_i32, %c0_i32_0 : i32, i32, i32
  }
  func.func @transform_6(%arg0: i32) -> (i32, i32) {
    %c0_i32 = arith.constant 0 : i32
    %c0_i32_0 = arith.constant 0 : i32
    %c0_i32_1 = arith.constant 0 : i32
    return %c0_i32, %c0_i32_0 : i32, i32
  }
  func.func @transform_7(%arg0: i32) -> (i32, i32) {
    %c0_i32 = arith.constant 0 : i32
    %c0_i32_0 = arith.constant 0 : i32
    %c0_i32_1 = arith.constant 0 : i32
    return %c0_i32, %c0_i32_0 : i32, i32
  }
  func.func @transform_8(%arg0: i32) -> (i32, i32, i32) {
    %c0_i32 = arith.constant 0 : i32
    %c0_i32_0 = arith.constant 0 : i32
    %c0_i32_1 = arith.constant 0 : i32
    return %arg0, %c0_i32, %c0_i32_0 : i32, i32, i32
  }
}

</mosaic_0001>

<llo_original>
// kernel: tpu_custom_call.1
$region0: #{tpu_custom_call.1}
  #allocation0 [shape = 'u32[]', space=smem, size = 0x4, offset = 0x4, fixed_abs, tag = 'smem constant byte address 0x4 - core index']
  #allocation1 [shape = 'u32[144,128]{1,0:T(1,128)}', space=vmem, size = 0x12000, scoped, tag = 'internal scratch']
  %s0 = inlined_call_operand.vmem [shape: bf16[4,16,16], index: 0, kind: input, shape index: {}]
  %s1 = inlined_call_operand.hbm [shape: bf16[4,16,64], index: 1, kind: input, shape index: {}]
  %s2 = inlined_call_operand.vmem [shape: f32[1,64], index: 2, kind: input, shape index: {}]
  %s3 = inlined_call_operand.vmem [shape: bf16[64,32], index: 3, kind: input, shape index: {}]
  %s4 = inlined_call_operand.vmem [shape: f32[1,32], index: 4, kind: input, shape index: {}]
  %s5 = inlined_call_operand.vmem [shape: bf16[4,8,16], index: 5, kind: input, shape index: {}]
  %s6 = inlined_call_operand.vmem [shape: bf16[32,128], index: 6, kind: input, shape index: {}]
  %s7 = inlined_call_operand.vmem [shape: f32[1,128], index: 7, kind: input, shape index: {}]
  %s8 = inlined_call_operand.hbm [shape: f32[4,8,128], index: 8, kind: output, shape index: {}]
  %s9 = sld [smem:[#allocation0]]
  $region69: #{tpu_custom_call.1} parent=0
    _
  %s11 = ssub.s32 1, %s9
  %s12 = scalar_select 0, %s11, %s9
  $region1: #{tpu_custom_call.1} parent=0
    #allocation2 [shape = 'u8[8192]{0}', space=vmem, size = 0x2000, scoped, tag = 'input window, operand 1']
    #allocation3 [shape = 's32[2]{0}', space=sflag, size = 0x8, scoped, tag = 'scoped memory for tpu_custom_call.1']
    #allocation4 [shape = 's32[2]{0}', space=sflag, size = 0x8, scoped, tag = 'scoped memory for tpu_custom_call.1']
    #allocation5 [shape = 'u8[8192]{0}', space=vmem, size = 0x2000, scoped, tag = 'output window, operand 0']
    %13 = vsyncpa [#allocation3], 0
    %s14 = scalar_lea.sflag [#allocation3], 1
    %15 = vsyncpa %s14, 0
    %16 = vsyncpa [#allocation4], 0
    %s17 = scalar_lea.sflag [#allocation4], 1
    %18 = vsyncpa %s17, 0
    loop: start=0, step=1, limit=6
    $region2: #{tpu_custom_call.1} parent=1 // loop_pre_header
      _
    $region3: #{tpu_custom_call.1} parent=1 // loop_header
      %s20 = sphi 0, %s24
      %p21 = scmp.ge.s32.totalorder %s20, 6
      %s30 = sphi 0, %s32
      %s33 = sphi 0, %s30
      %s34 = sphi 0, %s33
      %s50 = sphi 0, %s34
      %s56 = sphi 0, %s58
      %s59 = sphi 0, %s56
      %s60 = sphi 0, %s59
      %s76 = sphi 0, %s60
      %s80 = sphi 0, %s80
      %s82 = sphi 0, %s80
      %s83 = sphi 0, %s82
      %s97 = sphi 0, %s83
      %s101 = sphi 0, %s101
      %s103 = sphi 0, %s101
      %s104 = sphi 0, %s103
      %s118 = sphi 0, %s104
      %s122 = sphi 0, %s122
      %s124 = sphi 0, %s122
      %s125 = sphi 0, %s124
      %s139 = sphi 0, %s125
      %s145 = sphi 0, %s147
      %s148 = sphi 0, %s145
      %s149 = sphi 0, %s148
      %s165 = sphi 0, %s149
      %s169 = sphi 0, %s169
      %s171 = sphi 0, %s169
      %s172 = sphi 0, %s171
      %s186 = sphi 0, %s172
      %s190 = sphi 0, %s190
      %s192 = sphi 0, %s190
      %s193 = sphi 0, %s192
      %s207 = sphi 0, %s193
      %s213 = sphi 0, %s215
      %s216 = sphi 0, %s213
      %s217 = sphi 0, %s216
      %s233 = sphi 0, %s217
    $region4: #{tpu_custom_call.1} parent=1 // loop_header_branch
      %23 = sbr.rel (%p21) target = $region8
    $region5: #{tpu_custom_call.1} parent=1 // loop_body
      %s25 = ssub.s32 %s20, 1
      %s26 = ssub.s32 %s20, 2
      %s27 = sadd.s32 %s20, 1
      %s28 = ssub.s32 %s20, %s27
      %p29 = scmp.eq.s32.totalorder %s28, 0
      %s31 = sadd.s32 %s30, 1
      %s32 = scalar_select %p29, %s30, %s31
      %p35 = pneg %p29
      %p36 = scmp.eq.s32.totalorder %s20, 3
      %p37 = por %p35, %p36
      %p38 = scmp.ne.s32.totalorder %s30, %s33
      %p39 = scmp.eq.s32.totalorder %s20, 0
      %p40 = por %p38, %p39
      %p41 = scmp.ne.s32.totalorder %s30, %s33
      %p42 = scmp.eq.s32.totalorder %s25, 3
      %p43 = por %p41, %p42
      %p44 = scmp.ne.s32.totalorder %s33, %s34
      %p45 = scmp.eq.s32.totalorder %s25, 0
      %p46 = por %p44, %p45
      %p47 = scmp.ne.s32.totalorder %s33, %s34
      %p48 = scmp.eq.s32.totalorder %s26, 3
      %p49 = por %p47, %p48
      %p51 = scmp.ne.s32.totalorder %s34, %s50
      %p52 = scmp.eq.s32.totalorder %s26, 0
      %p53 = por %p51, %p52
      %s54 = ssub.s32 %s20, %s27
      %p55 = scmp.eq.s32.totalorder %s54, 0
      %s57 = sadd.s32 %s56, 1
      %s58 = scalar_select %p55, %s56, %s57
      %p61 = pneg %p55
      %p62 = scmp.eq.s32.totalorder %s20, 3
      %p63 = por %p61, %p62
      %p64 = scmp.ne.s32.totalorder %s56, %s59
      %p65 = scmp.eq.s32.totalorder %s20, 0
      %p66 = por %p64, %p65
      %p67 = scmp.ne.s32.totalorder %s56, %s59
      %p68 = scmp.eq.s32.totalorder %s25, 3
      %p69 = por %p67, %p68
      %p70 = scmp.ne.s32.totalorder %s59, %s60
      %p71 = scmp.eq.s32.totalorder %s25, 0
      %p72 = por %p70, %p71
      %p73 = scmp.ne.s32.totalorder %s59, %s60
      %p74 = scmp.eq.s32.totalorder %s26, 3
      %p75 = por %p73, %p74
      %p77 = scmp.ne.s32.totalorder %s60, %s76
      %p78 = scmp.eq.s32.totalorder %s26, 0
      %p79 = por %p77, %p78
      %s81 = sadd.s32 %s80, 1
      %p84 = scmp.eq.s32.totalorder %s20, 3
      %p85 = scmp.ne.s32.totalorder %s80, %s82
      %p86 = scmp.eq.s32.totalorder %s20, 0
      %p87 = por %p85, %p86
      %p88 = scmp.ne.s32.totalorder %s80, %s82
      %p89 = scmp.eq.s32.totalorder %s25, 3
      %p90 = por %p88, %p89
      %p91 = scmp.ne.s32.totalorder %s82, %s83
      %p92 = scmp.eq.s32.totalorder %s25, 0
      %p93 = por %p91, %p92
      %p94 = scmp.ne.s32.totalorder %s82, %s83
      %p95 = scmp.eq.s32.totalorder %s26, 3
      %p96 = por %p94, %p95
      %p98 = scmp.ne.s32.totalorder %s83, %s97
      %p99 = scmp.eq.s32.totalorder %s26, 0
      %p100 = por %p98, %p99
      %s102 = sadd.s32 %s101, 1
      %p105 = scmp.eq.s32.totalorder %s20, 3
      %p106 = scmp.ne.s32.totalorder %s101, %s103
      %p107 = scmp.eq.s32.totalorder %s20, 0
      %p108 = por %p106, %p107
      %p109 = scmp.ne.s32.totalorder %s101, %s103
      %p110 = scmp.eq.s32.totalorder %s25, 3
      %p111 = por %p109, %p110
      %p112 = scmp.ne.s32.totalorder %s103, %s104
      %p113 = scmp.eq.s32.totalorder %s25, 0
      %p114 = por %p112, %p113
      %p115 = scmp.ne.s32.totalorder %s103, %s104
      %p116 = scmp.eq.s32.totalorder %s26, 3
      %p117 = por %p115, %p116
      %p119 = scmp.ne.s32.totalorder %s104, %s118
      %p120 = scmp.eq.s32.totalorder %s26, 0
      %p121 = por %p119, %p120
      %s123 = sadd.s32 %s122, 1
      %p126 = scmp.eq.s32.totalorder %s20, 3
      %p127 = scmp.ne.s32.totalorder %s122, %s124
      %p128 = scmp.eq.s32.totalorder %s20, 0
      %p129 = por %p127, %p128
      %p130 = scmp.ne.s32.totalorder %s122, %s124
      %p131 = scmp.eq.s32.totalorder %s25, 3
      %p132 = por %p130, %p131
      %p133 = scmp.ne.s32.totalorder %s124, %s125
      %p134 = scmp.eq.s32.totalorder %s25, 0
      %p135 = por %p133, %p134
      %p136 = scmp.ne.s32.totalorder %s124, %s125
      %p137 = scmp.eq.s32.totalorder %s26, 3
      %p138 = por %p136, %p137
      %p140 = scmp.ne.s32.totalorder %s125, %s139
      %p141 = scmp.eq.s32.totalorder %s26, 0
      %p142 = por %p140, %p141
      %s143 = ssub.s32 %s20, %s27
      %p144 = scmp.eq.s32.totalorder %s143, 0
      %s146 = sadd.s32 %s145, 1
      %s147 = scalar_select %p144, %s145, %s146
      %p150 = pneg %p144
      %p151 = scmp.eq.s32.totalorder %s20, 3
      %p152 = por %p150, %p151
      %p153 = scmp.ne.s32.totalorder %s145, %s148
      %p154 = scmp.eq.s32.totalorder %s20, 0
      %p155 = por %p153, %p154
      %p156 = scmp.ne.s32.totalorder %s145, %s148
      %p157 = scmp.eq.s32.totalorder %s25, 3
      %p158 = por %p156, %p157
      %p159 = scmp.ne.s32.totalorder %s148, %s149
      %p160 = scmp.eq.s32.totalorder %s25, 0
      %p161 = por %p159, %p160
      %p162 = scmp.ne.s32.totalorder %s148, %s149
      %p163 = scmp.eq.s32.totalorder %s26, 3
      %p164 = por %p162, %p163
      %p166 = scmp.ne.s32.totalorder %s149, %s165
      %p167 = scmp.eq.s32.totalorder %s26, 0
      %p168 = por %p166, %p167
      %s170 = sadd.s32 %s169, 1
      %p173 = scmp.eq.s32.totalorder %s20, 3
      %p174 = scmp.ne.s32.totalorder %s169, %s171
      %p175 = scmp.eq.s32.totalorder %s20, 0
      %p176 = por %p174, %p175
      %p177 = scmp.ne.s32.totalorder %s169, %s171
      %p178 = scmp.eq.s32.totalorder %s25, 3
      %p179 = por %p177, %p178
      %p180 = scmp.ne.s32.totalorder %s171, %s172
      %p181 = scmp.eq.s32.totalorder %s25, 0
      %p182 = por %p180, %p181
      %p183 = scmp.ne.s32.totalorder %s171, %s172
      %p184 = scmp.eq.s32.totalorder %s26, 3
      %p185 = por %p183, %p184
      %p187 = scmp.ne.s32.totalorder %s172, %s186
      %p188 = scmp.eq.s32.totalorder %s26, 0
      %p189 = por %p187, %p188
      %s191 = sadd.s32 %s190, 1
      %p194 = scmp.eq.s32.totalorder %s20, 3
      %p195 = scmp.ne.s32.totalorder %s190, %s192
      %p196 = scmp.eq.s32.totalorder %s20, 0
      %p197 = por %p195, %p196
      %p198 = scmp.ne.s32.totalorder %s190, %s192
      %p199 = scmp.eq.s32.totalorder %s25, 3
      %p200 = por %p198, %p199
      %p201 = scmp.ne.s32.totalorder %s192, %s193
      %p202 = scmp.eq.s32.totalorder %s25, 0
      %p203 = por %p201, %p202
      %p204 = scmp.ne.s32.totalorder %s192, %s193
      %p205 = scmp.eq.s32.totalorder %s26, 3
      %p206 = por %p204, %p205
      %p208 = scmp.ne.s32.totalorder %s193, %s207
      %p209 = scmp.eq.s32.totalorder %s26, 0
      %p210 = por %p208, %p209
      %s211 = ssub.s32 %s20, %s27
      %p212 = scmp.eq.s32.totalorder %s211, 0
      %s214 = sadd.s32 %s213, 1
      %s215 = scalar_select %p212, %s213, %s214
      %p218 = pneg %p212
      %p219 = scmp.eq.s32.totalorder %s20, 3
      %p220 = por %p218, %p219
      %p221 = scmp.ne.s32.totalorder %s213, %s216
      %p222 = scmp.eq.s32.totalorder %s20, 0
      %p223 = por %p221, %p222
      %p224 = scmp.ne.s32.totalorder %s213, %s216
      %p225 = scmp.eq.s32.totalorder %s25, 3
      %p226 = por %p224, %p225
      %p227 = scmp.ne.s32.totalorder %s216, %s217
      %p228 = scmp.eq.s32.totalorder %s25, 0
      %p229 = por %p227, %p228
      %p230 = scmp.ne.s32.totalorder %s216, %s217
      %p231 = scmp.eq.s32.totalorder %s26, 3
      %p232 = por %p230, %p231
      %p234 = scmp.ne.s32.totalorder %s217, %s233
      %p235 = scmp.eq.s32.totalorder %s26, 0
      %p236 = por %p234, %p235
      %p237 = scmp.le.s32.totalorder 1, %s20
      %p238 = scmp.lt.s32.totalorder %s20, 5
      %p239 = pnand %p237, %p238
      %p240 = pneg %p239
      // Predicated region
      $region9: #{tpu_custom_call.1} parent=5 // pred_check
        _
      $region10: #{tpu_custom_call.1} parent=5 // pred_check_branch
        %242 = sbr.rel (%p239) target = $region12
      $region11: #{tpu_custom_call.1} parent=5 // pred_region
        %s243 = ssub.s32 %s20, 1
        // Predicated region
        $region13: #{tpu_custom_call.1} parent=11 // pred_check
          %p244 = pneg %p93
        $region14: #{tpu_custom_call.1} parent=11 // pred_check_branch
          %246 = sbr.rel (%p244) target = $region16
        $region15: #{tpu_custom_call.1} parent=11 // pred_region
          _
        $region16: #{tpu_custom_call.1} parent=11 // pred_fallthru
          _
        // Predicated region
        $region17: #{tpu_custom_call.1} parent=11 // pred_check
          %p247 = pneg %p114
        $region18: #{tpu_custom_call.1} parent=11 // pred_check_branch
          %249 = sbr.rel (%p247) target = $region20
        $region19: #{tpu_custom_call.1} parent=11 // pred_region
          _
        $region20: #{tpu_custom_call.1} parent=11 // pred_fallthru
          _
        // Predicated region
        $region21: #{tpu_custom_call.1} parent=11 // pred_check
          %p250 = pneg %p135
        $region22: #{tpu_custom_call.1} parent=11 // pred_check_branch
          %252 = sbr.rel (%p250) target = $region24
        $region23: #{tpu_custom_call.1} parent=11 // pred_region
          _
        $region24: #{tpu_custom_call.1} parent=11 // pred_fallthru
          _
        // Predicated region
        $region25: #{tpu_custom_call.1} parent=11 // pred_check
          %p253 = pneg %p182
        $region26: #{tpu_custom_call.1} parent=11 // pred_check_branch
          %255 = sbr.rel (%p253) target = $region28
        $region27: #{tpu_custom_call.1} parent=11 // pred_region
          _
        $region28: #{tpu_custom_call.1} parent=11 // pred_fallthru
          _
        // Predicated region
        $region29: #{tpu_custom_call.1} parent=11 // pred_check
          %p256 = pneg %p203
        $region30: #{tpu_custom_call.1} parent=11 // pred_check_branch
          %258 = sbr.rel (%p256) target = $region32
        $region31: #{tpu_custom_call.1} parent=11 // pred_region
          _
        $region32: #{tpu_custom_call.1} parent=11 // pred_fallthru
          _
      $region12: #{tpu_custom_call.1} parent=5 // pred_fallthru
        _
      %p259 = scmp.lt.s32.totalorder %s20, 4
      // Predicated region
      $region33: #{tpu_custom_call.1} parent=5 // pred_check
        %p260 = pneg %p259
      $region34: #{tpu_custom_call.1} parent=5 // pred_check_branch
        %262 = sbr.rel (%p260) target = $region36
      $region35: #{tpu_custom_call.1} parent=5 // pred_region
        // Predicated region
        $region37: #{tpu_custom_call.1} parent=35 // pred_check
          %p263 = pneg %p40
        $region38: #{tpu_custom_call.1} parent=35 // pred_check_branch
          %265 = sbr.rel (%p263) target = $region40
        $region39: #{tpu_custom_call.1} parent=35 // pred_region
          %p266 = scmp.lt.s32.totalorder %s20, 3
          %s267 = scalar_select %p266, %s20, 3
          %s268 = smul.addr %s267, 2
          %s269 = smul.addr %s268, 4
          %s270 = scalar_lea.vmem %s0, %s269
        $region40: #{tpu_custom_call.1} parent=35 // pred_fallthru
          _
        // Predicated region
        $region41: #{tpu_custom_call.1} parent=35 // pred_check
          %p271 = pneg %p66
        $region42: #{tpu_custom_call.1} parent=35 // pred_check_branch
          %273 = sbr.rel (%p271) target = $region44
        $region43: #{tpu_custom_call.1} parent=35 // pred_region
          %s274 = sand.u32 %s56, 1
          %s275 = scalar_lea.sflag [#allocation3], %s274
          %s276 = sand.u32 %s56, 1
          %s277 = smul.addr %s276, 8
          %s278 = scalar_lea.vmem [#allocation2], %s277
          %s280 = ssub.s32 128, 128
          %281 = vsyncadd %s275, %s280
          %s282 = smul.addr %s20, 2
          %s283 = smul.addr %s282, 64
          %s284 = scalar_lea.hbm %s1, %s283
          %s285 = sshll.u32 %s278, 4
          %s286 = int_to_ptr.vmem [resolvable:$true] %s285
          %291 = dma.hbm_to_vmem [thread:$0]  %s284, 128, %s286, %s275, 64, 64, 4
        $region44: #{tpu_custom_call.1} parent=35 // pred_fallthru
          _
        // Predicated region
        $region45: #{tpu_custom_call.1} parent=35 // pred_check
          %p292 = pneg %p155
        $region46: #{tpu_custom_call.1} parent=35 // pred_check_branch
          %294 = sbr.rel (%p292) target = $region48
        $region47: #{tpu_custom_call.1} parent=35 // pred_region
          %p295 = scmp.lt.s32.totalorder %s20, 3
          %s296 = scalar_select %p295, %s20, 3
          %s297 = smul.addr %s296, 4
          %s298 = scalar_lea.vmem %s5, %s297
        $region48: #{tpu_custom_call.1} parent=35 // pred_fallthru
          _
      $region36: #{tpu_custom_call.1} parent=5 // pred_fallthru
        _
      %p299 = scmp.le.s32.totalorder 1, %s20
      %p300 = scmp.lt.s32.totalorder %s20, 5
      %p301 = pnand %p299, %p300
      %p302 = pneg %p301
      // Predicated region
      $region49: #{tpu_custom_call.1} parent=5 // pred_check
        _
      $region50: #{tpu_custom_call.1} parent=5 // pred_check_branch
        %304 = sbr.rel (%p301) target = $region52
      $region51: #{tpu_custom_call.1} parent=5 // pred_region
        %s305 = ssub.s32 %s20, 1
        %s306 = sand.u32 %s59, 1
        %s307 = scalar_lea.sflag [#allocation3], %s306
        %s308 = sand.u32 %s59, 1
        %s309 = smul.addr %s308, 8
        %s310 = scalar_lea.vmem [#allocation2], %s309
        // Predicated region
        $region53: #{tpu_custom_call.1} parent=51 // pred_check
          %p311 = pneg %p72
        $region54: #{tpu_custom_call.1} parent=51 // pred_check_branch
          %313 = sbr.rel (%p311) target = $region56
        $region55: #{tpu_custom_call.1} parent=51 // pred_region
          %314 = dma.done %s307, 128
        $region56: #{tpu_custom_call.1} parent=51 // pred_fallthru
          _
        %p315 = scmp.lt.s32.totalorder %s25, 3
        %s316 = scalar_select %p315, %s25, 3
        %s317 = smul.addr %s316, 2
        %s318 = smul.addr %s317, 4
        %s319 = scalar_lea.vmem %s0, %s318
        %p320 = pneg %p46
        %p321 = pneg %p43
        %s322 = sand.u32 %s59, 1
        %s323 = scalar_lea.sflag [#allocation3], %s322
        %s324 = sand.u32 %s59, 1
        %s325 = smul.addr %s324, 8
        %s326 = scalar_lea.vmem [#allocation2], %s325
        %p327 = pneg %p72
        %p328 = pneg %p69
        %p329 = pneg %p93
        %p330 = pneg %p90
        %p331 = pneg %p114
        %p332 = pneg %p111
        %p333 = pneg %p135
        %p334 = pneg %p132
        %p335 = scmp.lt.s32.totalorder %s25, 3
        %s336 = scalar_select %p335, %s25, 3
        %s337 = smul.addr %s336, 4
        %s338 = scalar_lea.vmem %s5, %s337
        %p339 = pneg %p161
        %p340 = pneg %p158
        %p341 = pneg %p182
        %p342 = pneg %p179
        %p343 = pneg %p203
        %p344 = pneg %p200
        %p345 = pneg %p229
        %p346 = pneg %p226
        %s347 = sand.u32 %s216, 1
        %s348 = scalar_lea.sflag [#allocation4], %s347
        %s349 = sand.u32 %s216, 1
        %s350 = smul.addr %s349, 8
        %s351 = scalar_lea.vmem [#allocation5], %s350
        %p352 = scmp.lt.s32.totalorder %s25, 3
        %s353 = scalar_select %p352, %s25, 3
        %s354 = smul.addr %s353, 2
        %s355 = smul.addr %s354, 4
        %s356 = scalar_lea.vmem %s0, %s355
        %p357 = scmp.lt.s32.totalorder %s25, 3
        %s358 = scalar_select %p357, %s25, 3
        %s359 = smul.addr %s358, 4
        %s360 = scalar_lea.vmem %s5, %s359
        %v362 = vld [vmem:[%s356] sm:$0xf]
        %v363 = vld [vmem:[%s356 + $0x4] sm:$0xf]
        %v364 = vld [vmem:[%s310] sm:$0xf]
        %v365 = vld [vmem:[%s310 + $0x4] sm:$0xf]
        %v366 = vld [vmem:[%s2] sm:$0x1]
        %v368 = vlaneseq
        %v369 = vshrl.u32 %v368, 7
        %v370 = vsub.s32 0, %v369
        %v371 = vrot.slane %v366, %v370
        %v375 = vunpack.c.l.b16 %v362
        %v376 = vunpack.c.l.b16 %v363
        %v377 = vpack.c.b16 %v376, %v375
        %v380 = vunpack.c.l.b16 %v364
        %v381 = vunpack.c.l.b16 %v365
        %v382 = vpack.c.b16 %v381, %v380
        %vm384 = vcmask 130048
        %v386 = vsel %vm384, %v377, 0
        %388 = vmatprep.subr.bf16.mxu0 0
        %389 = vmatpush1.bf16.msra.mxu0 %v382
        %390 = vmatprep.subr.bf16.mxu0 0
        %391 = vmatpush1.bf16.msra.mxu0 0
        %392 = vmatprep.subr.bf16.mxu0 0
        %393 = vmatpush1.bf16.msra.mxu0 0
        %394 = vmatprep.subr.bf16.mxu0 0
        %395 = vmatpush1.bf16.msra.mxu0 0
        %396 = vmatprep.subr.bf16.mxu0 0
        %397 = vmatpush1.bf16.msra.mxu0 0
        %398 = vmatprep.subr.bf16.mxu0 0
        %399 = vmatpush1.bf16.msra.mxu0 0
        %400 = vmatprep.subr.bf16.mxu0 0
        %401 = vmatpush1.bf16.msra.mxu0 0
        %402 = vmatprep.subr.bf16.mxu0 0
        %403 = vmatpush1.bf16.msra.mxu0 0
        %404 = vmatprep.subr.bf16.mxu0 0
        %405 = vmatpush1.bf16.msra.mxu0 0
        %406 = vmatprep.subr.bf16.mxu0 0
        %407 = vmatpush1.bf16.msra.mxu0 0
        %408 = vmatprep.subr.bf16.mxu0 0
        %409 = vmatpush1.bf16.msra.mxu0 0
        %410 = vmatprep.subr.bf16.mxu0 0
        %411 = vmatpush1.bf16.msra.mxu0 0
        %412 = vmatprep.subr.bf16.mxu0 0
        %413 = vmatpush1.bf16.msra.mxu0 0
        %414 = vmatprep.subr.bf16.mxu0 0
        %415 = vmatpush1.bf16.msra.mxu0 0
        %416 = vmatprep.subr.bf16.mxu0 0
        %417 = vmatpush1.bf16.msra.mxu0 0
        %418 = vmatprep.subr.bf16.mxu0 0
        %419 = vmatpush1.bf16.msra.mxu0 0
        %420 = vmatprep.mubr.bf16.mxu0 0
        %421 = vmatmul.mubr.bf16.gmra.mrb[0].mxu0 %v386
        %v422 = vpop.f32.mrb[0].mxu0
        %v423 = vadd.f32 %v371, %v422
        %v424 = vpop.f32.mrb[0].mxu0
        %v425 = vpop.f32.mrb[0].mxu0
        %v426 = vadd.f32 %v371, %v425
        %v427 = vpop.f32.mrb[0].mxu0
        %428 = vdwg.mxu0
        %v429 = vmax.f32 %v423, 0.0
        %v430 = vmax.f32 %v426, 0.0
        %v431 = vpack.c.bf16 %v430, %v429
        %v432 = vld [vmem:[%s3] sm:$0xf]
        %v433 = vld [vmem:[%s3 + $0x4] sm:$0xf]
        %v434 = vld [vmem:[%s3 + $0x8] sm:$0xf]
        %v435 = vld [vmem:[%s3 + $0xc] sm:$0xf]
        %v436 = vld [vmem:[%s3 + $0x10] sm:$0xf]
        %v437 = vld [vmem:[%s3 + $0x14] sm:$0xf]
        %v438 = vld [vmem:[%s3 + $0x18] sm:$0xf]
        %v439 = vld [vmem:[%s3 + $0x1c] sm:$0xf]
        %v448 = vunpack.c.l.b16 %v432
        %v449 = vunpack.c.l.b16 %v433
        %v450 = vunpack.c.l.b16 %v434
        %v451 = vunpack.c.l.b16 %v435
        %v452 = vunpack.c.l.b16 %v436
        %v453 = vunpack.c.l.b16 %v437
        %v454 = vunpack.c.l.b16 %v438
        %v455 = vunpack.c.l.b16 %v439
        %v456 = vpack.c.b16 %v449, %v448
        %v457 = vpack.c.b16 %v451, %v450
        %v458 = vpack.c.b16 %v453, %v452
        %v459 = vpack.c.b16 %v455, %v454
        %vm464 = vcmask 523264
        %v466 = vsel %vm464, %v431, 0
        %468 = vmatprep.subr.bf16.mxu0 0
        %469 = vmatpush1.bf16.msra.mxu0 %v456
        %470 = vmatprep.subr.bf16.mxu0 0
        %471 = vmatpush1.bf16.msra.mxu0 %v457
        %472 = vmatprep.subr.bf16.mxu0 0
        %473 = vmatpush1.bf16.msra.mxu0 %v458
        %474 = vmatprep.subr.bf16.mxu0 0
        %475 = vmatpush1.bf16.msra.mxu0 %v459
        %476 = vmatprep.subr.bf16.mxu0 0
        %477 = vmatpush1.bf16.msra.mxu0 0
        %478 = vmatprep.subr.bf16.mxu0 0
        %479 = vmatpush1.bf16.msra.mxu0 0
        %480 = vmatprep.subr.bf16.mxu0 0
        %481 = vmatpush1.bf16.msra.mxu0 0
        %482 = vmatprep.subr.bf16.mxu0 0
        %483 = vmatpush1.bf16.msra.mxu0 0
        %484 = vmatprep.subr.bf16.mxu0 0
        %485 = vmatpush1.bf16.msra.mxu0 0
        %486 = vmatprep.subr.bf16.mxu0 0
        %487 = vmatpush1.bf16.msra.mxu0 0
        %488 = vmatprep.subr.bf16.mxu0 0
        %489 = vmatpush1.bf16.msra.mxu0 0
        %490 = vmatprep.subr.bf16.mxu0 0
        %491 = vmatpush1.bf16.msra.mxu0 0
        %492 = vmatprep.subr.bf16.mxu0 0
        %493 = vmatpush1.bf16.msra.mxu0 0
        %494 = vmatprep.subr.bf16.mxu0 0
        %495 = vmatpush1.bf16.msra.mxu0 0
        %496 = vmatprep.subr.bf16.mxu0 0
        %497 = vmatpush1.bf16.msra.mxu0 0
        %498 = vmatprep.subr.bf16.mxu0 0
        %499 = vmatpush1.bf16.msra.mxu0 0
        %500 = vmatprep.mubr.bf16.mxu0 0
        %501 = vmatmul.mubr.bf16.gmra.mrb[0].mxu0 %v466
        %v502 = vpop.f32.mrb[0].mxu0
        %v503 = vadd.f32 0.0, %v502
        %v504 = vpop.f32.mrb[0].mxu0
        %v505 = vpop.f32.mrb[0].mxu0
        %v506 = vadd.f32 0.0, %v505
        %v507 = vpop.f32.mrb[0].mxu0
        %508 = vdwg.mxu0
        %v509 = vpack.c.bf16 %v506, %v503
        %v510 = vld [vmem:[%s4] sm:$0x1]
        %v512 = vlaneseq
        %v513 = vshrl.u32 %v512, 7
        %v514 = vsub.s32 0, %v513
        %v515 = vrot.slane %v510, %v514
        %517 = vmatprep.subr.bf16.mxu0 0
        %518 = vmatpush1.bf16.msra.mxu0 %v509
        %519 = vmatprep.subr.bf16.mxu0 0
        %520 = vmatpush1.bf16.msra.mxu0 0
        %521 = vmatprep.subr.bf16.mxu0 0
        %522 = vmatpush1.bf16.msra.mxu0 0
        %523 = vmatprep.subr.bf16.mxu0 0
        %524 = vmatpush1.bf16.msra.mxu0 0
        %525 = vmatprep.subr.bf16.mxu0 0
        %526 = vmatpush1.bf16.msra.mxu0 0
        %527 = vmatprep.subr.bf16.mxu0 0
        %528 = vmatpush1.bf16.msra.mxu0 0
        %529 = vmatprep.subr.bf16.mxu0 0
        %530 = vmatpush1.bf16.msra.mxu0 0
        %531 = vmatprep.subr.bf16.mxu0 0
        %532 = vmatpush1.bf16.msra.mxu0 0
        %533 = vmatprep.subr.bf16.mxu0 0
        %534 = vmatpush1.bf16.msra.mxu0 0
        %535 = vmatprep.subr.bf16.mxu0 0
        %536 = vmatpush1.bf16.msra.mxu0 0
        %537 = vmatprep.subr.bf16.mxu0 0
        %538 = vmatpush1.bf16.msra.mxu0 0
        %539 = vmatprep.subr.bf16.mxu0 0
        %540 = vmatpush1.bf16.msra.mxu0 0
        %541 = vmatprep.subr.bf16.mxu0 0
        %542 = vmatpush1.bf16.msra.mxu0 0
        %543 = vmatprep.subr.bf16.mxu0 0
        %544 = vmatpush1.bf16.msra.mxu0 0
        %545 = vmatprep.subr.bf16.mxu0 0
        %546 = vmatpush1.bf16.msra.mxu0 0
        %547 = vmatprep.subr.bf16.mxu0 0
        %548 = vmatpush1.bf16.msra.mxu0 0
        %549 = vmatprep.mubr.bf16.mxu0 0
        %550 = vmatmul.mubr.bf16.gmra.mrb[0].mxu0 %v386
        %v551 = vpop.f32.mrb[0].mxu0
        %v552 = vadd.f32 %v515, %v551
        %v553 = vpop.f32.mrb[0].mxu0
        %v554 = vpop.f32.mrb[0].mxu0
        %v555 = vadd.f32 %v515, %v554
        %v556 = vpop.f32.mrb[0].mxu0
        %557 = vdwg.mxu0
        %v558 = vmax.f32 %v552, 0.0
        %v559 = vmax.f32 %v555, 0.0
        %v560 = vld [vmem:[%s360] sm:$0xf]
        %v561 = vpack.c.bf16 %v559, %v558
        %v563 = vsel %vm384, %v560, 0
        %565 = vmatprep.subr.bf16.mxu0 0
        %566 = vmatpush1.bf16.msra.mxu0 %v561
        %567 = vmatprep.subr.bf16.mxu0 0
        %568 = vmatpush1.bf16.msra.mxu0 0
        %569 = vmatprep.subr.bf16.mxu0 0
        %570 = vmatpush1.bf16.msra.mxu0 0
        %571 = vmatprep.subr.bf16.mxu0 0
        %572 = vmatpush1.bf16.msra.mxu0 0
        %573 = vmatprep.subr.bf16.mxu0 0
        %574 = vmatpush1.bf16.msra.mxu0 0
        %575 = vmatprep.subr.bf16.mxu0 0
        %576 = vmatpush1.bf16.msra.mxu0 0
        %577 = vmatprep.subr.bf16.mxu0 0
        %578 = vmatpush1.bf16.msra.mxu0 0
        %579 = vmatprep.subr.bf16.mxu0 0
        %580 = vmatpush1.bf16.msra.mxu0 0
        %581 = vmatprep.subr.bf16.mxu0 0
        %582 = vmatpush1.bf16.msra.mxu0 0
        %583 = vmatprep.subr.bf16.mxu0 0
        %584 = vmatpush1.bf16.msra.mxu0 0
        %585 = vmatprep.subr.bf16.mxu0 0
        %586 = vmatpush1.bf16.msra.mxu0 0
        %587 = vmatprep.subr.bf16.mxu0 0
        %588 = vmatpush1.bf16.msra.mxu0 0
        %589 = vmatprep.subr.bf16.mxu0 0
        %590 = vmatpush1.bf16.msra.mxu0 0
        %591 = vmatprep.subr.bf16.mxu0 0
        %592 = vmatpush1.bf16.msra.mxu0 0
        %593 = vmatprep.subr.bf16.mxu0 0
        %594 = vmatpush1.bf16.msra.mxu0 0
        %595 = vmatprep.subr.bf16.mxu0 0
        %596 = vmatpush1.bf16.msra.mxu0 0
        %597 = vmatprep.mubr.bf16.mxu0 0
        %598 = vmatmul.mubr.bf16.gmra.mrb[0].mxu0 %v563
        %v599 = vpop.f32.mrb[0].mxu0
        %v600 = vadd.f32 0.0, %v599
        %v601 = vpop.f32.mrb[0].mxu0
        %v602 = vpop.f32.mrb[0].mxu0
        %v603 = vpop.f32.mrb[0].mxu0
        %604 = vdwg.mxu0
        %v605 = vpack.c.bf16 %v600, %v600
        %v606 = vld [vmem:[%s6] sm:$0xf]
        %v607 = vld [vmem:[%s6 + $0x4] sm:$0xf]
        %v608 = vld [vmem:[%s6 + $0x8] sm:$0xf]
        %v609 = vld [vmem:[%s6 + $0xc] sm:$0xf]
        %v610 = vld [vmem:[%s7] sm:$0x1]
        %v612 = vlaneseq
        %v613 = vshrl.u32 %v612, 7
        %v614 = vsub.s32 0, %v613
        %v615 = vrot.slane %v610, %v614
        %v621 = vunpack.c.l.b16 %v606
        %v622 = vunpack.c.l.b16 %v607
        %v623 = vunpack.c.l.b16 %v608
        %v624 = vunpack.c.l.b16 %v609
        %v625 = vpack.c.b16 %v622, %v621
        %v626 = vpack.c.b16 %v624, %v623
        %vm629 = vcmask 261120
        %v631 = vsel %vm629, %v605, 0
        %633 = vmatprep.subr.bf16.mxu0 0
        %634 = vmatpush1.bf16.msra.mxu0 %v625
        %635 = vmatprep.subr.bf16.mxu0 0
        %636 = vmatpush1.bf16.msra.mxu0 %v626
        %637 = vmatprep.subr.bf16.mxu0 0
        %638 = vmatpush1.bf16.msra.mxu0 0
        %639 = vmatprep.subr.bf16.mxu0 0
        %640 = vmatpush1.bf16.msra.mxu0 0
        %641 = vmatprep.subr.bf16.mxu0 0
        %642 = vmatpush1.bf16.msra.mxu0 0
        %643 = vmatprep.subr.bf16.mxu0 0
        %644 = vmatpush1.bf16.msra.mxu0 0
        %645 = vmatprep.subr.bf16.mxu0 0
        %646 = vmatpush1.bf16.msra.mxu0 0
        %647 = vmatprep.subr.bf16.mxu0 0
        %648 = vmatpush1.bf16.msra.mxu0 0
        %649 = vmatprep.subr.bf16.mxu0 0
        %650 = vmatpush1.bf16.msra.mxu0 0
        %651 = vmatprep.subr.bf16.mxu0 0
        %652 = vmatpush1.bf16.msra.mxu0 0
        %653 = vmatprep.subr.bf16.mxu0 0
        %654 = vmatpush1.bf16.msra.mxu0 0
        %655 = vmatprep.subr.bf16.mxu0 0
        %656 = vmatpush1.bf16.msra.mxu0 0
        %657 = vmatprep.subr.bf16.mxu0 0
        %658 = vmatpush1.bf16.msra.mxu0 0
        %659 = vmatprep.subr.bf16.mxu0 0
        %660 = vmatpush1.bf16.msra.mxu0 0
        %661 = vmatprep.subr.bf16.mxu0 0
        %662 = vmatpush1.bf16.msra.mxu0 0
        %663 = vmatprep.subr.bf16.mxu0 0
        %664 = vmatpush1.bf16.msra.mxu0 0
        %665 = vmatprep.mubr.bf16.mxu0 0
        %666 = vmatmul.mubr.bf16.gmra.mrb[0].mxu0 %v631
        %v667 = vpop.f32.mrb[0].mxu0
        %v668 = vadd.f32 %v615, %v667
        %v669 = vpop.f32.mrb[0].mxu0
        %v670 = vpop.f32.mrb[0].mxu0
        %v671 = vpop.f32.mrb[0].mxu0
        %672 = vdwg.mxu0
        %v673 = vlaneseq
        %v674 = vand.u32 %v673, 127
        %vm675 = vcmp.lt.s32.totalorder %v674, 4
        %v676 = vsel %vm675, %v668, -1e+30
        %677 = vmax.xlane.f32.xlu0 %v676
        %v678 = vpop.xlane.xlu0 %677
        %v679 = vsub.f32 %v676, %v678
        %v680 = vmul.f32 %v679, 1.442695
        %v681 = vpow.pop %v680
        %682 = vadd.xlane.f32.xlu0 %v681
        %v683 = vpop.xlane.xlu0 %682
        %v684 = vlog2.pop %v683
        %v685 = vmul.f32 %v684, 0.6931472
        %v686 = vsub.f32 %v679, %v685
        %687 = vst [vmem:[%s351] sm:$0xff] %v686
        %s688 = sand.u32 %s216, 1
        %s689 = scalar_lea.sflag [#allocation4], %s688
        %s690 = sand.u32 %s216, 1
        %s691 = smul.addr %s690, 8
        %s692 = scalar_lea.vmem [#allocation5], %s691
        // Predicated region
        $region57: #{tpu_custom_call.1} parent=51 // pred_check
          %p693 = pneg %p226
        $region58: #{tpu_custom_call.1} parent=51 // pred_check_branch
          %695 = sbr.rel (%p693) target = $region60
        $region59: #{tpu_custom_call.1} parent=51 // pred_region
          %s697 = ssub.s32 128, 128
          %698 = vsyncadd %s689, %s697
          %s699 = smul.addr %s25, 128
          %s700 = scalar_lea.hbm %s8, %s699
          %s702 = sshll.u32 %s692, 4
          %s703 = int_to_ptr.vmem [resolvable:$true] %s702
          %705 = dma.vmem_to_hbm [thread:$0]  %s703, 128, %s700, %s689
        $region60: #{tpu_custom_call.1} parent=51 // pred_fallthru
          _
      $region52: #{tpu_custom_call.1} parent=5 // pred_fallthru
        _
      %p706 = scmp.le.s32.totalorder 2, %s20
      // Predicated region
      $region61: #{tpu_custom_call.1} parent=5 // pred_check
        %p707 = pneg %p706
      $region62: #{tpu_custom_call.1} parent=5 // pred_check_branch
        %709 = sbr.rel (%p707) target = $region64
      $region63: #{tpu_custom_call.1} parent=5 // pred_region
        %s710 = ssub.s32 %s20, 2
        // Predicated region
        $region65: #{tpu_custom_call.1} parent=63 // pred_check
          %p711 = pneg %p232
        $region66: #{tpu_custom_call.1} parent=63 // pred_check_branch
          %713 = sbr.rel (%p711) target = $region68
        $region67: #{tpu_custom_call.1} parent=63 // pred_region
          %s714 = sand.u32 %s217, 1
          %s715 = scalar_lea.sflag [#allocation4], %s714
          %s716 = sand.u32 %s217, 1
          %s717 = smul.addr %s716, 8
          %s718 = scalar_lea.vmem [#allocation5], %s717
          %719 = dma.done %s715, 128
        $region68: #{tpu_custom_call.1} parent=63 // pred_fallthru
          _
      $region64: #{tpu_custom_call.1} parent=5 // pred_fallthru
        _
    $region6: #{tpu_custom_call.1} parent=1 // loop_footer
      %s24 = sadd.s32 1, %s20
    $region7: #{tpu_custom_call.1} parent=1 // loop_footer_branch
      %19 = sbr.rel target = $region3
    $region8: #{tpu_custom_call.1} parent=1 // loop_exit
      _
    %720 = vsyncpa [#allocation3], 1
    %s721 = scalar_lea.sflag [#allocation3], 1
    %722 = vsyncpa %s721, 1
    %723 = vsyncpa [#allocation4], 1
    %s724 = scalar_lea.sflag [#allocation4], 1
    %725 = vsyncpa %s724, 1

</llo_original>
